<compile_context>
chip_gen: v6e
topology: v6e:2x2x1
jax: 0.10.0
libtpu: 0.0.40
codegen_flags: <defaults>
</compile_context>

<pallas_src>
import jax
import jax.numpy as jnp
from jax.experimental import pallas as pl
from jax.experimental.pallas import tpu as pltpu

_LANE = 128


def pmf_kernel(u_ref, i_ref, out_ref):
    # u_ref, i_ref: (F, TB) tiles (factor on sublanes, batch on lanes).
    # out_ref: (1, TB) lane-dense ratings.
    u = u_ref[...].astype(jnp.float32)
    v = i_ref[...].astype(jnp.float32)
    out_ref[...] = jnp.sum(u * v, axis=0, keepdims=True)


def _pick_tile(batch, block_b):
    """Largest lane-aligned tile <= block_b that still leaves >= 2 grid steps
    (when the batch allows it), so v7x can shard the batch across both TCs."""
    cap = max(_LANE, (block_b // _LANE) * _LANE)
    if batch <= 2 * _LANE:
        return _LANE
    half = pl.cdiv(pl.cdiv(batch, 2), _LANE) * _LANE
    return min(cap, half)


def pmf_forward(user_emb, item_emb, users_index, items_index, *, block_b=32768):
    """Pallas-backed PMF forward.

    user_emb: (n_users, F) f32 or bf16
    item_emb: (n_items, F) f32 or bf16
    users_index, items_index: (B,) int32
    returns: (B,) f32
    """
    # Embedding gather (glue, plain JAX) then transpose to batch-on-lanes.
    # TODO(synk): for large B with small tables, move the gather in-kernel
    # (VMEM-resident tables, blocked int32 index inputs) to drop the (B,F)
    # intermediates from HBM entirely.
    u_g = jnp.take(user_emb, users_index, axis=0)   # (B, F)
    i_g = jnp.take(item_emb, items_index, axis=0)   # (B, F)
    B, F = u_g.shape
    u_t = u_g.T                                     # (F, B)
    i_t = i_g.T                                     # (F, B)

    tb = _pick_tile(B, block_b)
    grid = pl.cdiv(B, tb)   # partial last block handled by Pallas (no padding)

    out = pl.pallas_call(
        pmf_kernel,
        out_shape=jax.ShapeDtypeStruct((1, B), jnp.float32),
        grid_spec=pltpu.PrefetchScalarGridSpec(
            num_scalar_prefetch=0,
            grid=(grid,),
            in_specs=[
                pl.BlockSpec((F, tb), lambda i: (0, i)),   # user tile
                pl.BlockSpec((F, tb), lambda i: (0, i)),   # item tile
            ],
            out_specs=pl.BlockSpec((1, tb), lambda i: (0, i)),
        ),
        compiler_params=pltpu.CompilerParams(
            dimension_semantics=("parallel",),
            allow_input_fusion=[True, True],
            vmem_limit_bytes=32 * 1024 * 1024,
        ),
    )(u_t, i_t)

    return out[0, :]


# Jitted wrapper so the gather/transpose can fuse into the pallas input DMA.
pmf_forward_jit = jax.jit(pmf_forward, static_argnames=("block_b",))


def reference_forward(user_emb, item_emb, users_index, items_index):
    u = jnp.take(user_emb, users_index, axis=0).astype(jnp.float32)
    i = jnp.take(item_emb, items_index, axis=0).astype(jnp.float32)
    return jnp.sum(u * i, axis=1)


if __name__ == "__main__":
    # Small shapes mirroring PMF.__init__ defaults (n_factors=20).
    n_users, n_items, n_factors = 10, 12, 20
    batch = 8

    key = jax.random.PRNGKey(0)
    k_ue, k_ie, k_u, k_i, k_u2, k_i2 = jax.random.split(key, 6)

    # Embeddings ~ 0.1 * U[0,1), matching the init scale in the module.
    user_emb = 0.1 * jax.random.uniform(k_ue, (n_users, n_factors),
                                        dtype=jnp.float32)
    item_emb = 0.1 * jax.random.uniform(k_ie, (n_items, n_factors),
                                        dtype=jnp.float32)

    users_index = jax.random.randint(k_u, (batch,), 0, n_users, dtype=jnp.int32)
    items_index = jax.random.randint(k_i, (batch,), 0, n_items, dtype=jnp.int32)

    # f32 storage (matches PyTorch module numerics), tiny single-block batch.
    rating = pmf_forward_jit(user_emb, item_emb, users_index, items_index)
    rating = jax.block_until_ready(rating)
    expected = reference_forward(user_emb, item_emb, users_index, items_index)
    assert rating.shape == (batch,)
    assert jnp.allclose(rating, expected, atol=1e-6, rtol=1e-6)

    # Larger, lane-unaligned batch: exercises grid >= 2 and the un-padded
    # partial last block path.
    batch2 = 300
    users_index2 = jax.random.randint(k_u2, (batch2,), 0, n_users, dtype=jnp.int32)
    items_index2 = jax.random.randint(k_i2, (batch2,), 0, n_items, dtype=jnp.int32)
    rating2 = pmf_forward_jit(user_emb, item_emb, users_index2, items_index2)
    rating2 = jax.block_until_ready(rating2)
    expected2 = reference_forward(user_emb, item_emb, users_index2, items_index2)
    assert rating2.shape == (batch2,)
    assert jnp.allclose(rating2, expected2, atol=1e-6, rtol=1e-6)

    # bf16 storage path (halves HBM bytes; f32 math inside the kernel).
    ue16 = user_emb.astype(jnp.bfloat16)
    ie16 = item_emb.astype(jnp.bfloat16)
    rating16 = pmf_forward_jit(ue16, ie16, users_index2, items_index2)
    rating16 = jax.block_until_ready(rating16)
    expected16 = reference_forward(ue16, ie16, users_index2, items_index2)
    assert rating16.shape == (batch2,)
    assert jnp.allclose(rating16, expected16, atol=1e-3, rtol=1e-2)

    print("KERNEL_OK")
</pallas_src>

<mosaic_0001>
module attributes {stable_mosaic.version = 11 : i64} {
  func.func @pmf_kernel(%arg0: i32, %arg1: memref<20x128xf32, #tpu.memory_space<vmem>>, %arg2: memref<20x128xf32, #tpu.memory_space<vmem>>, %arg3: memref<1x128xf32, #tpu.memory_space<vmem>>) attributes {dimension_semantics = [#tpu.dimension_semantics<parallel>], iteration_bounds = array<i64: 1>, scalar_prefetch = 0 : i64, scratch_operands = 0 : i64, tpu.core_type = #tpu.core_type<tc>, window_params = [{transform_indices = @transform_0, window_bounds = array<i64: 20, 128>}, {transform_indices = @transform_1, window_bounds = array<i64: 20, 128>}, {transform_indices = @transform_2, window_bounds = array<i64: 1, 128>}]} {
    %c0 = arith.constant 0 : index
    %c0_0 = arith.constant 0 : index
    %0 = vector.load %arg1[%c0, %c0_0] : memref<20x128xf32, #tpu.memory_space<vmem>>, vector<20x128xf32>
    %c0_1 = arith.constant 0 : index
    %c0_2 = arith.constant 0 : index
    %1 = vector.load %arg2[%c0_1, %c0_2] : memref<20x128xf32, #tpu.memory_space<vmem>>, vector<20x128xf32>
    %2 = arith.mulf %0, %1 : vector<20x128xf32>
    %cst = arith.constant dense<0.000000e+00> : vector<128xf32>
    %3 = vector.multi_reduction <add>, %2, %cst [0] : vector<20x128xf32> to vector<128xf32>
    %4 = vector.shape_cast %3 : vector<128xf32> to vector<1x128xf32>
    %c0_3 = arith.constant 0 : index
    %c0_4 = arith.constant 0 : index
    %5 = vector.load %arg3[%c0_3, %c0_4] : memref<1x128xf32, #tpu.memory_space<vmem>>, vector<1x128xf32>
    tpu.vector_store %arg3[%c0_3, %c0_4], %4 {strides = array<i32>} : memref<1x128xf32, #tpu.memory_space<vmem>>, vector<1x128xf32>,
    return
  }
  func.func @transform_0(%arg0: i32) -> (i32, i32) {
    %c0_i32 = arith.constant 0 : i32
    %c0_i32_0 = arith.constant 0 : i32
    return %c0_i32, %arg0 : i32, i32
  }
  func.func @transform_1(%arg0: i32) -> (i32, i32) {
    %c0_i32 = arith.constant 0 : i32
    %c0_i32_0 = arith.constant 0 : i32
    return %c0_i32, %arg0 : i32, i32
  }
  func.func @transform_2(%arg0: i32) -> (i32, i32) {
    %c0_i32 = arith.constant 0 : i32
    %c0_i32_0 = arith.constant 0 : i32
    return %c0_i32, %arg0 : i32, i32
  }
}

</mosaic_0001>

<llo_original>
// kernel: pmf_forward.2
$region0: #{pmf_forward.2}
  #allocation0 [shape = 'u32[]', space=smem, size = 0x4, offset = 0x4, fixed_abs, tag = 'smem constant byte address 0x4 - core index']
  #allocation1 [shape = 'u32[144,128]{1,0:T(1,128)}', space=vmem, size = 0x12000, scoped, tag = 'internal scratch']
  %s0 = inlined_call_operand.vmem [shape: f32[8,20], index: 0, kind: input, shape index: {}]
  %s1 = inlined_call_operand.vmem [shape: f32[8,20], index: 1, kind: input, shape index: {}]
  %s2 = inlined_call_operand.<no memory space> [shape: f32[], index: 2, kind: input, shape index: {}]
  %s3 = inlined_call_operand.vmem [shape: pred[8], index: 3, kind: input, shape index: {}]
  %s4 = inlined_call_operand.vmem [shape: pred[8], index: 4, kind: input, shape index: {}]
  %s5 = inlined_call_operand.hbm [shape: f32[1,8], index: 5, kind: output, shape index: {}]
  %s6 = sld [smem:[#allocation0]]
  $region26: #{pmf_forward.2} parent=0
    _
  %s8 = ssub.s32 1, %s6
  %s9 = scalar_select 0, %s8, %s6
  %v10 = vstv %s2
  %v11 = vstv %s2
  $region1: #{pmf_forward.2} parent=0
    #allocation2 [shape = 'u8[512]{0}', space=vmem, size = 0x400, scoped, tag = 'output window, operand 0, single buffered']
    #allocation3 [shape = 's32[1]{0}', space=sflag, size = 0x4, scoped, tag = 'scoped memory for pmf_forward.2']
    #allocation4 [shape = 'u8[12288]{0}', space=vmem, size = 0x3000, dematerialized = true, scoped, tag = 'FusionAdapter Buffer %fusion.2 = f32[20,8]{1,0:T(8,128)} fusion(%param_1.23, %param_2.13, %param_4.3), kind=kLoop, calls=%fused_computation.4.clone, metadata={op_name="jit(pmf_forward)/jit(_take)/select_n" stack_frame_id=1}']
    #allocation5 [shape = 'u8[12288]{0}', space=vmem, size = 0x3000, dematerialized = true, scoped, tag = 'FusionAdapter Buffer %fusion.1 = f32[20,8]{1,0:T(8,128)} fusion(%param_0.21, %param_2.13, %param_3.4), kind=kLoop, calls=%fused_computation.3.clone, metadata={op_name="jit(pmf_forward)/jit(_take)/select_n" stack_frame_id=2}']
    %12 = vsyncpa [#allocation3], 0
    // Predicated region
    $region2: #{pmf_forward.2} parent=1 // pred_check
      _
    $region3: #{pmf_forward.2} parent=1 // pred_check_branch
      %14 = sbr.rel (0) target = $region5
    $region4: #{pmf_forward.2} parent=1 // pred_region
      _
    $region5: #{pmf_forward.2} parent=1 // pred_fallthru
      _
    // Predicated region
    $region6: #{pmf_forward.2} parent=1 // pred_check
      _
    $region7: #{pmf_forward.2} parent=1 // pred_check_branch
      %16 = sbr.rel (0) target = $region9
    $region8: #{pmf_forward.2} parent=1 // pred_region
      _
    $region9: #{pmf_forward.2} parent=1 // pred_fallthru
      _
    // Predicated region
    $region10: #{pmf_forward.2} parent=1 // pred_check
      _
    $region11: #{pmf_forward.2} parent=1 // pred_check_branch
      %18 = sbr.rel (0) target = $region13
    $region12: #{pmf_forward.2} parent=1 // pred_region
      _
    $region13: #{pmf_forward.2} parent=1 // pred_fallthru
      _
    // Predicated region
    $region14: #{pmf_forward.2} parent=1 // pred_check
      _
    $region15: #{pmf_forward.2} parent=1 // pred_check_branch
      %20 = sbr.rel (0) target = $region17
    $region16: #{pmf_forward.2} parent=1 // pred_region
      _
    $region17: #{pmf_forward.2} parent=1 // pred_fallthru
      _
    %v21 = vld [vmem:[%s1] sm:$0xff]
    %v22 = vld [vmem:[%s4] ss:$0 sm:$0xff]
    %v24 = vshra.s32 %v22, 0
    %v25 = vand.u32 %v24, 255
    %26 = xla_tuple %v25, %v21, %v10
    %27 = xla_tuple %26
    %vm28 = vcmp.ne.s32.totalorder %v25, 0
    %v29 = vsel %vm28, %v21, %v10
    %30 = xla_tuple %v29
    %s32 = ssub.s32 256, 1
    %33 = vst [vmem:[#allocation4] sm:%s32] %v29
    %s34 = scalar_lea.vmem %s1, 8
    %v35 = vld [vmem:[%s34] sm:$0xff]
    %36 = xla_tuple %v25, %v35, %v10
    %37 = xla_tuple %36
    %vm38 = vcmp.ne.s32.totalorder %v25, 0
    %v39 = vsel %vm38, %v35, %v10
    %40 = xla_tuple %v39
    %s41 = scalar_lea.vmem [#allocation4], 8
    %s43 = ssub.s32 256, 1
    %44 = vst [vmem:[%s41] sm:%s43] %v39
    %s45 = scalar_lea.vmem %s1, 16
    %v46 = vld [vmem:[%s45] sm:$0xff]
    %47 = xla_tuple %v25, %v46, %v10
    %48 = xla_tuple %47
    %vm49 = vcmp.ne.s32.totalorder %v25, 0
    %v50 = vsel %vm49, %v46, %v10
    %51 = xla_tuple %v50
    %s52 = scalar_lea.vmem [#allocation4], 16
    %s54 = ssub.s32 256, 1
    %55 = vst [vmem:[%s52] sm:%s54] %v50
    %v56 = vld [vmem:[%s0] sm:$0xff]
    %v57 = vld [vmem:[%s3] ss:$0 sm:$0xff]
    %v59 = vshra.s32 %v57, 0
    %v60 = vand.u32 %v59, 255
    %61 = xla_tuple %v60, %v56, %v11
    %62 = xla_tuple %61
    %vm63 = vcmp.ne.s32.totalorder %v60, 0
    %v64 = vsel %vm63, %v56, %v11
    %65 = xla_tuple %v64
    %s67 = ssub.s32 256, 1
    %68 = vst [vmem:[#allocation5] sm:%s67] %v64
    %s69 = scalar_lea.vmem %s0, 8
    %v70 = vld [vmem:[%s69] sm:$0xff]
    %71 = xla_tuple %v60, %v70, %v11
    %72 = xla_tuple %71
    %vm73 = vcmp.ne.s32.totalorder %v60, 0
    %v74 = vsel %vm73, %v70, %v11
    %75 = xla_tuple %v74
    %s76 = scalar_lea.vmem [#allocation5], 8
    %s78 = ssub.s32 256, 1
    %79 = vst [vmem:[%s76] sm:%s78] %v74
    %s80 = scalar_lea.vmem %s0, 16
    %v81 = vld [vmem:[%s80] sm:$0xff]
    %82 = xla_tuple %v60, %v81, %v11
    %83 = xla_tuple %82
    %vm84 = vcmp.ne.s32.totalorder %v60, 0
    %v85 = vsel %vm84, %v81, %v11
    %86 = xla_tuple %v85
    %s87 = scalar_lea.vmem [#allocation5], 16
    %s89 = ssub.s32 256, 1
    %90 = vst [vmem:[%s87] sm:%s89] %v85
    %v91 = vld [vmem:[#allocation4] sm:$0xff]
    %v92 = vld [vmem:[#allocation4 + $0x8] sm:$0xff]
    %v93 = vld [vmem:[#allocation4 + $0x10] sm:$0xf]
    %v94 = vld [vmem:[#allocation5] sm:$0xff]
    %v95 = vld [vmem:[#allocation5 + $0x8] sm:$0xff]
    %v96 = vld [vmem:[#allocation5 + $0x10] sm:$0xf]
    %v97 = vmul.f32 %v91, %v94
    %v98 = vmul.f32 %v92, %v95
    %v99 = vmul.f32 %v93, %v96
    %v100 = vadd.f32 %v97, %v98
    %vm101 = vcmask 1043456
    %v102 = vsel %vm101, %v99, 0.0
    %v103 = vadd.f32 %v100, %v102
    %v104 = vrot.slane %v103, 4
    %v105 = vadd.f32 %v103, %v104
    %v106 = vrot.slane %v105, 2
    %v107 = vadd.f32 %v105, %v106
    %v108 = vrot.slane %v107, 1
    %v109 = vadd.f32 %v107, %v108
    %110 = vst [vmem:[#allocation2] sm:$0x1] %v109
    // Predicated region
    $region18: #{pmf_forward.2} parent=1 // pred_check
      _
    $region19: #{pmf_forward.2} parent=1 // pred_check_branch
      %112 = sbr.rel (0) target = $region21
    $region20: #{pmf_forward.2} parent=1 // pred_region
      %s114 = ssub.s32 16, 16
      %115 = vsyncadd [#allocation3], %s114
      %s117 = sshll.u32 [#allocation2], 4
      %s118 = int_to_ptr.vmem [resolvable:$true] %s117
      %120 = dma.vmem_to_hbm [thread:$0]  %s118, 16, %s5, [#allocation3]
    $region21: #{pmf_forward.2} parent=1 // pred_fallthru
      _
    // Predicated region
    $region22: #{pmf_forward.2} parent=1 // pred_check
      _
    $region23: #{pmf_forward.2} parent=1 // pred_check_branch
      %122 = sbr.rel (0) target = $region25
    $region24: #{pmf_forward.2} parent=1 // pred_region
      %123 = dma.done [#allocation3], 16
    $region25: #{pmf_forward.2} parent=1 // pred_fallthru
      _
    %124 = vsyncpa [#allocation3], 1

</llo_original>
